<compile_context>
chip_gen: v7x
topology: tpu7x:2x2x1
jax: 0.10.0
libtpu: 0.0.40
codegen_flags: <defaults>
</compile_context>

<pallas_src>
import functools

import jax
import jax.numpy as jnp
from jax.experimental import pallas as pl
from jax.experimental.pallas import tpu as pltpu

EPS = 1e-5


def _rmsnorm_kernel(x_ref, w_ref, o_ref, *, inv_d):
    # x_ref: (block_rows, D) tile of rows; w_ref: (1, D) weight; o_ref: (block_rows, D)
    x = x_ref[...].astype(jnp.float32)
    w = w_ref[...].astype(jnp.float32)                      # (1, D), broadcasts over rows
    ms = jnp.sum(x * x, axis=-1, keepdims=True) * inv_d     # (block_rows, 1)
    inv = jax.lax.rsqrt(ms + EPS)                           # EUP
    o_ref[...] = (x * inv * w).astype(o_ref.dtype)


def _sublane_multiple(dtype):
    itemsize = jnp.dtype(dtype).itemsize
    return {4: 8, 2: 16, 1: 32}.get(itemsize, 8)


def _pick_block_rows(rows, d_model, dtype):
    """Choose a row-tile size from a VMEM budget, dtype-aware, preferring an
    exact divisor of `rows` so every tile store is full/unmasked."""
    itemsize = jnp.dtype(dtype).itemsize
    m = _sublane_multiple(dtype)

    if rows <= m:
        # Single full-extent block (block dim == full array dim is always legal).
        return rows

    # Budget for the double-buffered in + out tiles (4 copies of one tile).
    # Kept small enough that (IO buffers + f32 compute temps) fit v7x's 64 MiB.
    io_budget = 32 * 1024 * 1024
    bytes_per_row = d_model * itemsize
    cap = (io_budget // (4 * bytes_per_row)) // m * m
    cap = max(m, min(cap, 2048))

    # Keep the grid at >= 2 steps when possible so both TensorCores (v7x
    # megacore) get work on this memory-bound kernel.
    half = (rows // 2) // m * m
    if half >= m:
        cap = min(cap, half)
    cap = min(cap, (rows // m) * m)
    cap = max(cap, m)

    # Prefer an exact divisor of rows (multiple of the sublane count) — avoids
    # masked partial stores in the last tile.
    if rows % m == 0:
        br = cap
        while br >= m:
            if rows % br == 0:
                return br
            br -= m
    return cap


def rmsnorm(x, weight, *, block_rows=None):
    """x: (..., d_model); weight: (d_model,). Returns same shape/dtype as x."""
    orig_shape = x.shape
    d_model = orig_shape[-1]
    rows = 1
    for s in orig_shape[:-1]:
        rows *= s
    x2 = x.reshape(rows, d_model)
    w2 = weight.reshape(1, d_model)

    if block_rows is None:
        block_rows = _pick_block_rows(rows, d_model, x.dtype)

    grid = (pl.cdiv(rows, block_rows),)

    # Explicit scoped-VMEM limit: double-buffered in+out tiles, f32 compute
    # temporaries, weight, plus headroom. Clamped well under v7x's 64 MiB.
    itemsize = jnp.dtype(x.dtype).itemsize
    tile_io_bytes = block_rows * d_model * itemsize
    tile_f32_bytes = block_rows * d_model * 4
    vmem_limit = 4 * tile_io_bytes + 2 * tile_f32_bytes + d_model * 4 + (2 << 20)
    vmem_limit = int(min(max(vmem_limit, 32 << 20), 120 << 20))

    kernel = functools.partial(_rmsnorm_kernel, inv_d=1.0 / d_model)

    out = pl.pallas_call(
        kernel,
        out_shape=jax.ShapeDtypeStruct((rows, d_model), x.dtype),
        grid_spec=pltpu.PrefetchScalarGridSpec(
            num_scalar_prefetch=0,
            grid=grid,
            in_specs=[
                pl.BlockSpec((block_rows, d_model), lambda i: (i, 0)),
                pl.BlockSpec((1, d_model), lambda i: (0, 0)),
            ],
            out_specs=pl.BlockSpec((block_rows, d_model), lambda i: (i, 0)),
        ),
        compiler_params=pltpu.CompilerParams(
            dimension_semantics=("parallel",),
            vmem_limit_bytes=vmem_limit,
        ),
    )(x2, w2)

    return out.reshape(orig_shape)


def _ref_rmsnorm(x, weight):
    xf = x.astype(jnp.float32)
    wf = weight.astype(jnp.float32)
    y = xf * jax.lax.rsqrt(jnp.mean(xf * xf, axis=-1, keepdims=True) + EPS) * wf
    return y.astype(x.dtype)


if __name__ == "__main__":
    key = jax.random.PRNGKey(0)

    # Small shapes consistent with the Mamba RMSNorm module.
    batch, seq, d_model = 2, 8, 32
    x = jax.random.normal(key, (batch, seq, d_model), dtype=jnp.float32)
    # nn.Parameter(torch.ones(d_model)) -> deterministic ones
    weight = jnp.ones((d_model,), dtype=jnp.float32)

    y = rmsnorm(x, weight)
    jax.block_until_ready(y)
    ref = _ref_rmsnorm(x, weight)
    assert y.shape == x.shape and y.dtype == x.dtype
    assert jnp.allclose(y, ref, atol=1e-5, rtol=1e-5)

    # Second shape exercising the auto block-size selection (divisible rows).
    key2 = jax.random.PRNGKey(1)
    x2 = jax.random.normal(key2, (2, 64, 128), dtype=jnp.float32)
    w2 = jnp.ones((128,), dtype=jnp.float32)
    y2 = rmsnorm(x2, w2)
    jax.block_until_ready(y2)
    assert jnp.allclose(y2, _ref_rmsnorm(x2, w2), atol=1e-5, rtol=1e-5)

    # Third shape: ragged row count (21 rows) exercising the pad-free path
    # where the last tile is clamped by Pallas (no wrapper pad/slice).
    key3 = jax.random.PRNGKey(2)
    x3 = jax.random.normal(key3, (3, 7, 128), dtype=jnp.float32)
    w3 = jnp.ones((128,), dtype=jnp.float32)
    y3 = rmsnorm(x3, w3)
    jax.block_until_ready(y3)
    assert jnp.allclose(y3, _ref_rmsnorm(x3, w3), atol=1e-5, rtol=1e-5)

    # Fourth shape: bf16 input (dtype-aware sublane multiple of 16).
    key4 = jax.random.PRNGKey(3)
    x4 = jax.random.normal(key4, (2, 16, 128), dtype=jnp.bfloat16)
    w4 = jnp.ones((128,), dtype=jnp.bfloat16)
    y4 = rmsnorm(x4, w4)
    jax.block_until_ready(y4)
    assert jnp.allclose(y4.astype(jnp.float32),
                        _ref_rmsnorm(x4, w4).astype(jnp.float32),
                        atol=2e-2, rtol=2e-2)

    print("KERNEL_OK")
</pallas_src>

<mosaic_0001>
module attributes {stable_mosaic.version = 11 : i64} {
  func.func @_rmsnorm_kernel(%arg0: i32, %arg1: memref<8x32xf32, #tpu.memory_space<vmem>>, %arg2: memref<1x32xf32, #tpu.memory_space<vmem>>, %arg3: memref<8x32xf32, #tpu.memory_space<vmem>>) attributes {dimension_semantics = [#tpu.dimension_semantics<parallel>], iteration_bounds = array<i64: 2>, scalar_prefetch = 0 : i64, scratch_operands = 0 : i64, tpu.core_type = #tpu.core_type<tc>, window_params = [{transform_indices = @transform_0, window_bounds = array<i64: 8, 32>}, {pipeline_mode = #tpu.pipeline_mode<synchronous>, transform_indices = @transform_1, window_bounds = array<i64: 1, 32>}, {transform_indices = @transform_2, window_bounds = array<i64: 8, 32>}]} {
    %c0 = arith.constant 0 : index
    %c0_0 = arith.constant 0 : index
    %0 = vector.load %arg1[%c0, %c0_0] : memref<8x32xf32, #tpu.memory_space<vmem>>, vector<8x32xf32>
    %c0_1 = arith.constant 0 : index
    %c0_2 = arith.constant 0 : index
    %1 = vector.load %arg2[%c0_1, %c0_2] : memref<1x32xf32, #tpu.memory_space<vmem>>, vector<1x32xf32>
    %2 = arith.mulf %0, %0 : vector<8x32xf32>
    %cst = arith.constant dense<0.000000e+00> : vector<8xf32>
    %3 = vector.multi_reduction <add>, %2, %cst [1] : vector<8x32xf32> to vector<8xf32>
    %4 = vector.shape_cast %3 : vector<8xf32> to vector<8x1xf32>
    %cst_3 = arith.constant 3.125000e-02 : f32
    %5 = vector.broadcast %cst_3 : f32 to vector<8x1xf32>
    %6 = arith.mulf %4, %5 : vector<8x1xf32>
    %cst_4 = arith.constant 9.99999974E-6 : f32
    %7 = vector.broadcast %cst_4 : f32 to vector<8x1xf32>
    %8 = arith.addf %6, %7 : vector<8x1xf32>
    %9 = math.rsqrt %8 : vector<8x1xf32>
    %10 = vector.broadcast %9 : vector<8x1xf32> to vector<8x32xf32>
    %11 = arith.mulf %0, %10 : vector<8x32xf32>
    %12 = vector.broadcast %1 : vector<1x32xf32> to vector<8x32xf32>
    %13 = arith.mulf %11, %12 : vector<8x32xf32>
    %c0_5 = arith.constant 0 : index
    %c0_6 = arith.constant 0 : index
    %14 = vector.load %arg3[%c0_5, %c0_6] : memref<8x32xf32, #tpu.memory_space<vmem>>, vector<8x32xf32>
    tpu.vector_store %arg3[%c0_5, %c0_6], %13 {strides = array<i32>} : memref<8x32xf32, #tpu.memory_space<vmem>>, vector<8x32xf32>,
    return
  }
  func.func @transform_0(%arg0: i32) -> (i32, i32) {
    %c0_i32 = arith.constant 0 : i32
    %c0_i32_0 = arith.constant 0 : i32
    return %arg0, %c0_i32 : i32, i32
  }
  func.func @transform_1(%arg0: i32) -> (i32, i32) {
    %c0_i32 = arith.constant 0 : i32
    %c0_i32_0 = arith.constant 0 : i32
    %c0_i32_1 = arith.constant 0 : i32
    return %c0_i32, %c0_i32_0 : i32, i32
  }
  func.func @transform_2(%arg0: i32) -> (i32, i32) {
    %c0_i32 = arith.constant 0 : i32
    %c0_i32_0 = arith.constant 0 : i32
    return %arg0, %c0_i32 : i32, i32
  }
}

</mosaic_0001>

<llo_original>
// kernel: tpu_custom_call.1
$region0: #{tpu_custom_call.1}
  #allocation0 [shape = 'u32[]', space=smem, size = 0x4, offset = 0x4, fixed_abs, tag = 'smem constant byte address 0x4 - core index']
  #allocation1 [shape = 'u32[144,128]{1,0:T(1,128)}', space=vmem, size = 0x12000, scoped, tag = 'internal scratch']
  %s0 = inlined_call_operand.hbm [shape: f32[16,32], index: 0, kind: input, shape index: {}]
  %s1 = inlined_call_operand.vmem [shape: f32[1,32], index: 1, kind: input, shape index: {}]
  %s2 = inlined_call_operand.hbm [shape: f32[16,32], index: 2, kind: output, shape index: {}]
  %s3 = sld [smem:[#allocation0]]
  $region45: #{tpu_custom_call.1} parent=0
    _
  %s5 = ssub.s32 1, %s3
  %s6 = scalar_select 0, %s5, %s3
  $region1: #{tpu_custom_call.1} parent=0
    #allocation2 [shape = 'u8[8192]{0}', space=vmem, size = 0x2000, scoped, tag = 'input window, operand 0']
    #allocation3 [shape = 's32[2]{0}', space=sflag, size = 0x8, scoped, tag = 'scoped memory for tpu_custom_call.1']
    #allocation4 [shape = 's32[2]{0}', space=sflag, size = 0x8, scoped, tag = 'scoped memory for tpu_custom_call.1']
    #allocation5 [shape = 'u8[8192]{0}', space=vmem, size = 0x2000, scoped, tag = 'output window, operand 0']
    %7 = vsyncpa [#allocation3], 0
    %s8 = scalar_lea.sflag [#allocation3], 1
    %9 = vsyncpa %s8, 0
    %10 = vsyncpa [#allocation4], 0
    %s11 = scalar_lea.sflag [#allocation4], 1
    %12 = vsyncpa %s11, 0
    loop: start=0, step=1, limit=4
    $region2: #{tpu_custom_call.1} parent=1 // loop_pre_header
      _
    $region3: #{tpu_custom_call.1} parent=1 // loop_header
      %s14 = sphi 0, %s18
      %p15 = scmp.ge.s32.totalorder %s14, 4
      %s24 = sphi 0, %s26
      %s27 = sphi 0, %s24
      %s28 = sphi 0, %s27
      %s44 = sphi 0, %s28
      %s48 = sphi 0, %s48
      %s50 = sphi 0, %s48
      %s51 = sphi 0, %s50
      %s65 = sphi 0, %s51
      %s71 = sphi 0, %s73
      %s74 = sphi 0, %s71
      %s75 = sphi 0, %s74
      %s91 = sphi 0, %s75
    $region4: #{tpu_custom_call.1} parent=1 // loop_header_branch
      %17 = sbr.rel (%p15) target = $region8
    $region5: #{tpu_custom_call.1} parent=1 // loop_body
      %s19 = ssub.s32 %s14, 1
      %s20 = ssub.s32 %s14, 2
      %s21 = sadd.s32 %s14, 1
      %s22 = ssub.s32 %s14, %s21
      %p23 = scmp.eq.s32.totalorder %s22, 0
      %s25 = sadd.s32 %s24, 1
      %s26 = scalar_select %p23, %s24, %s25
      %p29 = pneg %p23
      %p30 = scmp.eq.s32.totalorder %s14, 1
      %p31 = por %p29, %p30
      %p32 = scmp.ne.s32.totalorder %s24, %s27
      %p33 = scmp.eq.s32.totalorder %s14, 0
      %p34 = por %p32, %p33
      %p35 = scmp.ne.s32.totalorder %s24, %s27
      %p36 = scmp.eq.s32.totalorder %s19, 1
      %p37 = por %p35, %p36
      %p38 = scmp.ne.s32.totalorder %s27, %s28
      %p39 = scmp.eq.s32.totalorder %s19, 0
      %p40 = por %p38, %p39
      %p41 = scmp.ne.s32.totalorder %s27, %s28
      %p42 = scmp.eq.s32.totalorder %s20, 1
      %p43 = por %p41, %p42
      %p45 = scmp.ne.s32.totalorder %s28, %s44
      %p46 = scmp.eq.s32.totalorder %s20, 0
      %p47 = por %p45, %p46
      %s49 = sadd.s32 %s48, 1
      %p52 = scmp.eq.s32.totalorder %s14, 1
      %p53 = scmp.ne.s32.totalorder %s48, %s50
      %p54 = scmp.eq.s32.totalorder %s14, 0
      %p55 = por %p53, %p54
      %p56 = scmp.ne.s32.totalorder %s48, %s50
      %p57 = scmp.eq.s32.totalorder %s19, 1
      %p58 = por %p56, %p57
      %p59 = scmp.ne.s32.totalorder %s50, %s51
      %p60 = scmp.eq.s32.totalorder %s19, 0
      %p61 = por %p59, %p60
      %p62 = scmp.ne.s32.totalorder %s50, %s51
      %p63 = scmp.eq.s32.totalorder %s20, 1
      %p64 = por %p62, %p63
      %p66 = scmp.ne.s32.totalorder %s51, %s65
      %p67 = scmp.eq.s32.totalorder %s20, 0
      %p68 = por %p66, %p67
      %s69 = ssub.s32 %s14, %s21
      %p70 = scmp.eq.s32.totalorder %s69, 0
      %s72 = sadd.s32 %s71, 1
      %s73 = scalar_select %p70, %s71, %s72
      %p76 = pneg %p70
      %p77 = scmp.eq.s32.totalorder %s14, 1
      %p78 = por %p76, %p77
      %p79 = scmp.ne.s32.totalorder %s71, %s74
      %p80 = scmp.eq.s32.totalorder %s14, 0
      %p81 = por %p79, %p80
      %p82 = scmp.ne.s32.totalorder %s71, %s74
      %p83 = scmp.eq.s32.totalorder %s19, 1
      %p84 = por %p82, %p83
      %p85 = scmp.ne.s32.totalorder %s74, %s75
      %p86 = scmp.eq.s32.totalorder %s19, 0
      %p87 = por %p85, %p86
      %p88 = scmp.ne.s32.totalorder %s74, %s75
      %p89 = scmp.eq.s32.totalorder %s20, 1
      %p90 = por %p88, %p89
      %p92 = scmp.ne.s32.totalorder %s75, %s91
      %p93 = scmp.eq.s32.totalorder %s20, 0
      %p94 = por %p92, %p93
      %p95 = scmp.le.s32.totalorder 1, %s14
      %p96 = scmp.lt.s32.totalorder %s14, 3
      %p97 = pnand %p95, %p96
      %p98 = pneg %p97
      // Predicated region
      $region9: #{tpu_custom_call.1} parent=5 // pred_check
        _
      $region10: #{tpu_custom_call.1} parent=5 // pred_check_branch
        %100 = sbr.rel (%p97) target = $region12
      $region11: #{tpu_custom_call.1} parent=5 // pred_region
        %s101 = ssub.s32 %s14, 1
        // Predicated region
        $region13: #{tpu_custom_call.1} parent=11 // pred_check
          %p102 = pneg %p61
        $region14: #{tpu_custom_call.1} parent=11 // pred_check_branch
          %104 = sbr.rel (%p102) target = $region16
        $region15: #{tpu_custom_call.1} parent=11 // pred_region
          _
        $region16: #{tpu_custom_call.1} parent=11 // pred_fallthru
          _
      $region12: #{tpu_custom_call.1} parent=5 // pred_fallthru
        _
      %p105 = scmp.lt.s32.totalorder %s14, 2
      // Predicated region
      $region17: #{tpu_custom_call.1} parent=5 // pred_check
        %p106 = pneg %p105
      $region18: #{tpu_custom_call.1} parent=5 // pred_check_branch
        %108 = sbr.rel (%p106) target = $region20
      $region19: #{tpu_custom_call.1} parent=5 // pred_region
        // Predicated region
        $region21: #{tpu_custom_call.1} parent=19 // pred_check
          %p109 = pneg %p34
        $region22: #{tpu_custom_call.1} parent=19 // pred_check_branch
          %111 = sbr.rel (%p109) target = $region24
        $region23: #{tpu_custom_call.1} parent=19 // pred_region
          %s112 = sand.u32 %s24, 1
          %s113 = scalar_lea.sflag [#allocation3], %s112
          %s114 = sand.u32 %s24, 1
          %s115 = smul.addr %s114, 8
          %s116 = scalar_lea.vmem [#allocation2], %s115
          %s118 = ssub.s32 128, 128
          %119 = vsyncadd %s113, %s118
          %s120 = smul.addr %s14, 128
          %s121 = scalar_lea.hbm %s0, %s120
          %s123 = sshll.u32 %s116, 4
          %s124 = int_to_ptr.vmem [resolvable:$true] %s123
          %126 = dma.hbm_to_vmem [thread:$0]  %s121, 128, %s124, %s113
        $region24: #{tpu_custom_call.1} parent=19 // pred_fallthru
          _
      $region20: #{tpu_custom_call.1} parent=5 // pred_fallthru
        _
      %p127 = scmp.le.s32.totalorder 1, %s14
      %p128 = scmp.lt.s32.totalorder %s14, 3
      %p129 = pnand %p127, %p128
      %p130 = pneg %p129
      // Predicated region
      $region25: #{tpu_custom_call.1} parent=5 // pred_check
        _
      $region26: #{tpu_custom_call.1} parent=5 // pred_check_branch
        %132 = sbr.rel (%p129) target = $region28
      $region27: #{tpu_custom_call.1} parent=5 // pred_region
        %s133 = ssub.s32 %s14, 1
        %s134 = sand.u32 %s27, 1
        %s135 = scalar_lea.sflag [#allocation3], %s134
        %s136 = sand.u32 %s27, 1
        %s137 = smul.addr %s136, 8
        %s138 = scalar_lea.vmem [#allocation2], %s137
        // Predicated region
        $region29: #{tpu_custom_call.1} parent=27 // pred_check
          %p139 = pneg %p40
        $region30: #{tpu_custom_call.1} parent=27 // pred_check_branch
          %141 = sbr.rel (%p139) target = $region32
        $region31: #{tpu_custom_call.1} parent=27 // pred_region
          %142 = dma.done %s135, 128
        $region32: #{tpu_custom_call.1} parent=27 // pred_fallthru
          _
        %s143 = sand.u32 %s27, 1
        %s144 = scalar_lea.sflag [#allocation3], %s143
        %s145 = sand.u32 %s27, 1
        %s146 = smul.addr %s145, 8
        %s147 = scalar_lea.vmem [#allocation2], %s146
        %p148 = pneg %p40
        %p149 = pneg %p37
        %p150 = pneg %p61
        %p151 = pneg %p58
        %p152 = pneg %p87
        %p153 = pneg %p84
        %s154 = sand.u32 %s74, 1
        %s155 = scalar_lea.sflag [#allocation4], %s154
        %s156 = sand.u32 %s74, 1
        %s157 = smul.addr %s156, 8
        %s158 = scalar_lea.vmem [#allocation5], %s157
        %v159 = vld [vmem:[%s138] sm:$0xff]
        %v160 = vld [vmem:[%s1] sm:$0x1]
        %v161 = vmul.f32 %v159, %v159
        %vm162 = vcmask 261120
        %v163 = vsel %vm162, %v161, 0.0
        %164 = vadd.xlane.f32.xlu0 %v163
        %v165 = vpop.xlane.xlu0 %164
        %v166 = vmul.f32 %v165, 0.03125
        %v167 = vadd.f32 %v166, 1e-05
        %v168 = vrsqrt.pop %v167
        %v169 = vmul.f32 %v159, %v168
        %v171 = vlaneseq
        %v172 = vshrl.u32 %v171, 7
        %v173 = vsub.s32 0, %v172
        %v174 = vrot.slane %v160, %v173
        %v176 = vmul.f32 %v169, %v174
        %177 = vst.msk [vmem:[%s158] sm:$0xff] %vm162, %v176
        %s178 = sand.u32 %s74, 1
        %s179 = scalar_lea.sflag [#allocation4], %s178
        %s180 = sand.u32 %s74, 1
        %s181 = smul.addr %s180, 8
        %s182 = scalar_lea.vmem [#allocation5], %s181
        // Predicated region
        $region33: #{tpu_custom_call.1} parent=27 // pred_check
          %p183 = pneg %p84
        $region34: #{tpu_custom_call.1} parent=27 // pred_check_branch
          %185 = sbr.rel (%p183) target = $region36
        $region35: #{tpu_custom_call.1} parent=27 // pred_region
          %s187 = ssub.s32 128, 128
          %188 = vsyncadd %s179, %s187
          %s189 = smul.addr %s19, 128
          %s190 = scalar_lea.hbm %s2, %s189
          %s192 = sshll.u32 %s182, 4
          %s193 = int_to_ptr.vmem [resolvable:$true] %s192
          %195 = dma.vmem_to_hbm [thread:$0]  %s193, 128, %s190, %s179
        $region36: #{tpu_custom_call.1} parent=27 // pred_fallthru
          _
      $region28: #{tpu_custom_call.1} parent=5 // pred_fallthru
        _
      %p196 = scmp.le.s32.totalorder 2, %s14
      // Predicated region
      $region37: #{tpu_custom_call.1} parent=5 // pred_check
        %p197 = pneg %p196
      $region38: #{tpu_custom_call.1} parent=5 // pred_check_branch
        %199 = sbr.rel (%p197) target = $region40
      $region39: #{tpu_custom_call.1} parent=5 // pred_region
        %s200 = ssub.s32 %s14, 2
        // Predicated region
        $region41: #{tpu_custom_call.1} parent=39 // pred_check
          %p201 = pneg %p90
        $region42: #{tpu_custom_call.1} parent=39 // pred_check_branch
          %203 = sbr.rel (%p201) target = $region44
        $region43: #{tpu_custom_call.1} parent=39 // pred_region
          %s204 = sand.u32 %s75, 1
          %s205 = scalar_lea.sflag [#allocation4], %s204
          %s206 = sand.u32 %s75, 1
          %s207 = smul.addr %s206, 8
          %s208 = scalar_lea.vmem [#allocation5], %s207
          %209 = dma.done %s205, 128
        $region44: #{tpu_custom_call.1} parent=39 // pred_fallthru
          _
      $region40: #{tpu_custom_call.1} parent=5 // pred_fallthru
        _
    $region6: #{tpu_custom_call.1} parent=1 // loop_footer
      %s18 = sadd.s32 1, %s14
    $region7: #{tpu_custom_call.1} parent=1 // loop_footer_branch
      %13 = sbr.rel target = $region3
    $region8: #{tpu_custom_call.1} parent=1 // loop_exit
      _
    %210 = vsyncpa [#allocation3], 1
    %s211 = scalar_lea.sflag [#allocation3], 1
    %212 = vsyncpa %s211, 1
    %213 = vsyncpa [#allocation4], 1
    %s214 = scalar_lea.sflag [#allocation4], 1
    %215 = vsyncpa %s214, 1

</llo_original>
